<compile_context>
chip_gen: v6e
topology: v6e:2x2x1
jax: 0.10.0
libtpu: 0.0.40
codegen_flags: <defaults>
</compile_context>

<pallas_src>
import jax
import jax.numpy as jnp
from jax.experimental import pallas as pl
from jax.experimental.pallas import tpu as pltpu


BIT = 6                          # QuantReLU.bit
QLEVELS = float(2 ** BIT - 1)    # 63.0

_LANE = 128
_VMEM_BUDGET = 40 * 1024 * 1024  # working-set budget; safely under v7x's 64 MiB VMEM
_VMEM_CAP = 64 * 1024 * 1024     # never request more scoped VMEM than v7x physically has


def _round_up(v, mult):
    return ((v + mult - 1) // mult) * mult


def _static_positive(a):
    """Best-effort static check that alpha > 0 (needed to fold ReLU into the clip)."""
    if isinstance(a, (int, float)):
        return a > 0
    try:
        return float(a) > 0
    except (jax.errors.ConcretizationTypeError, TypeError):
        # Traced value: cannot verify statically; alpha > 0 is a documented
        # precondition (QuantReLU.act_alpha is initialised to 8.0).
        return True


def _footprint_bytes(tm, tk_h, dim_p, cbytes, obytes):
    """Double-buffered VMEM working set of one grid step."""
    x_tile   = 2 * tm * dim_p * cbytes        # input token tile (2 pipeline buffers)
    w1_slab  = 2 * dim_p * tk_h * cbytes      # W1^T column slab
    w2_slab  = 2 * tk_h * dim_p * cbytes      # W2^T row slab
    out_tile = 2 * tm * dim_p * obytes        # output token tile
    acc      = tm * dim_p * 4                 # f32 accumulator scratch
    interm   = 2 * tm * tk_h * 4              # layer-1 f32 intermediate (h and h_q)
    return x_tile + w1_slab + w2_slab + out_tile + acc + interm


def _pick_tiles(m, hidden_p0, dim_p, cbytes, obytes, tm_req, tk_req):
    """Token tile (tm) and hidden-chunk (tk_h) sizes under the VMEM budget."""
    if tm_req is not None:
        tm = _round_up(int(tm_req), 8)
    elif m <= 256:
        tm = _round_up(m, 8)                         # single token-grid step
    elif m <= 512:
        tm = _round_up(pl.cdiv(m, 2), 8)             # >=2 steps -> both v7x TCs busy
    else:
        tm = 512                                     # big tiles for v5e/v6e HBM eff.
    tk_h = _round_up(int(tk_req), _LANE) if tk_req is not None else min(hidden_p0, 512)

    # Shrink until the double-buffered working set fits the budget.
    while _footprint_bytes(tm, tk_h, dim_p, cbytes, obytes) > _VMEM_BUDGET:
        if tk_h > _LANE:
            tk_h = max(_LANE, ((tk_h // 2) // _LANE) * _LANE)
        elif tm > 8:
            tm = max(8, _round_up(tm // 2, 8))
        else:
            break
    return tm, tk_h


def ffn_kernel(alphas_ref, x_ref, w1_ref, w2_ref, o_ref, acc_ref):
    """One (token tile, hidden chunk) grid step.

    alphas_ref : SMEM (2,) f32 = [alpha_init_spike, alpha_spike1]   (scalar prefetch)
    x_ref      : (tm, dim_p)   token tile
    w1_ref     : (dim_p, tk_h) column slab of linear1.weight.T
    w2_ref     : (tk_h, dim_p) row slab of linear2.weight.T
    o_ref      : (tm, dim_p)   output tile (written on the last hidden chunk)
    acc_ref    : (tm, dim_p)   f32 accumulator scratch (persists across chunks)

    QuantReLU fused as  round(clip(v * (Q/a), 0, Q)) * (a/Q)  with Q = 2^bit - 1.
    The explicit relu is subsumed by the clip lower bound (alpha > 0), and
    folding Q into the scale removes one VPU multiply per element; for a
    power-of-two alpha this is bit-identical to the reference order, otherwise
    it may differ by one quant level at rare round-half ties.
    """
    k = pl.program_id(1)

    @pl.when(k == 0)
    def _init():
        acc_ref[...] = jnp.zeros_like(acc_ref)

    a1 = alphas_ref[0]
    s1 = QLEVELS / a1                 # pre-round scale (scalar, off the VPU hot path)
    post1 = a1 * (1.0 / QLEVELS)      # post-round scale

    # linear1 on the MXU: (tm, dim_p) @ (dim_p, tk_h) -> f32.
    h = jnp.dot(x_ref[...], w1_ref[...], preferred_element_type=jnp.float32)
    # init_spike (QuantReLU #1), applied per hidden chunk (elementwise -> exact).
    hq = jnp.round(jnp.clip(h * s1, 0.0, QLEVELS)) * post1

    # linear2 partial product on the MXU, accumulated over hidden chunks.
    acc_ref[...] += jnp.dot(hq.astype(w2_ref.dtype), w2_ref[...],
                            preferred_element_type=jnp.float32)

    @pl.when(k == pl.num_programs(1) - 1)
    def _finalize():
        a2 = alphas_ref[1]
        s2 = QLEVELS / a2
        post2 = a2 * (1.0 / QLEVELS)
        y = acc_ref[...]
        # spike1 (QuantReLU #2) + lane-dense (128-multiple) store.
        o_ref[...] = (jnp.round(jnp.clip(y * s2, 0.0, QLEVELS)) * post2
                      ).astype(o_ref.dtype)


def ffn_pallas(x, w1_t, w2_t, alpha1, alpha2, *,
               tm=None, tk_hidden=None, compute_dtype=None):
    """Fused FFN forward.

    x     : (..., dim)
    w1_t  : (dim, hidden)  = linear1.weight.T
    w2_t  : (hidden, dim)  = linear2.weight.T
    alpha1/alpha2 : QuantReLU act_alpha scalars (must be > 0).
    compute_dtype : optional explicit opt-in for bf16 MXU inputs (quant math and
                    accumulation stay f32; numerics differ slightly from f32).
    """
    orig_shape = x.shape
    out_dtype = x.dtype
    dim = orig_shape[-1]
    hidden = w1_t.shape[1]
    assert w1_t.shape == (dim, hidden) and w2_t.shape == (hidden, dim)
    assert _static_positive(alpha1), "alpha1 must be > 0 for the fused QuantReLU"
    assert _static_positive(alpha2), "alpha2 must be > 0 for the fused QuantReLU"

    compute_dtype = jnp.dtype(compute_dtype) if compute_dtype is not None \
        else jnp.dtype(out_dtype)
    cbytes = compute_dtype.itemsize
    obytes = jnp.dtype(out_dtype).itemsize

    x2d = x.reshape(-1, dim)
    m = x2d.shape[0]

    # Lane-dense feature dims (K of matmul1 / N of matmul2, and the hidden dim).
    dim_p = _round_up(dim, _LANE)
    hidden_p0 = _round_up(hidden, _LANE)

    tm, tk_h = _pick_tiles(m, hidden_p0, dim_p, cbytes, obytes, tm, tk_hidden)
    m_pad = _round_up(m, tm)
    hidden_p = _round_up(hidden, tk_h)       # multiple of tk_h (tk_h is a 128-multiple)

    # Zero padding: padded x columns meet padded W1 rows (zeros), padded hidden
    # columns quantize to 0 and meet padded W2 rows (zeros) -> results unchanged.
    x_p = jnp.pad(x2d, ((0, m_pad - m), (0, dim_p - dim))).astype(compute_dtype)
    w1_p = jnp.pad(w1_t, ((0, dim_p - dim), (0, hidden_p - hidden))).astype(compute_dtype)
    w2_p = jnp.pad(w2_t, ((0, hidden_p - hidden), (0, dim_p - dim))).astype(compute_dtype)

    alphas = jnp.stack([jnp.asarray(alpha1, jnp.float32).reshape(()),
                        jnp.asarray(alpha2, jnp.float32).reshape(())])

    n_tok = m_pad // tm
    n_hid = hidden_p // tk_h

    # Explicit scoped-VMEM budget from the real footprint (+headroom), capped at
    # v7x's physical 64 MiB; floor at the v6e/v7x default so small shapes keep
    # the compiler's usual scratch room.
    fp = _footprint_bytes(tm, tk_h, dim_p, cbytes, obytes)
    vmem_limit = max(32 << 20, min(_VMEM_CAP, int(fp * 1.4) + (4 << 20)))

    cost = pl.CostEstimate(
        flops=4 * m * dim * hidden,                       # two m x dim x hidden matmuls
        transcendentals=0,
        bytes_accessed=int(x_p.size * cbytes
                           + n_tok * (w1_p.size + w2_p.size) * cbytes
                           + m_pad * dim_p * obytes))

    out = pl.pallas_call(
        ffn_kernel,
        out_shape=jax.ShapeDtypeStruct((m_pad, dim_p), out_dtype),
        grid_spec=pltpu.PrefetchScalarGridSpec(
            num_scalar_prefetch=1,                        # alphas -> SMEM
            grid=(n_tok, n_hid),                          # (token tiles, hidden chunks)
            in_specs=[
                pl.BlockSpec((tm, dim_p), lambda i, k, a: (i, 0)),     # x token tile
                pl.BlockSpec((dim_p, tk_h), lambda i, k, a: (0, k)),   # W1^T column slab
                pl.BlockSpec((tk_h, dim_p), lambda i, k, a: (k, 0)),   # W2^T row slab
            ],
            out_specs=pl.BlockSpec((tm, dim_p), lambda i, k, a: (i, 0)),
            scratch_shapes=[pltpu.VMEM((tm, dim_p), jnp.float32)],     # f32 accumulator
        ),
        compiler_params=pltpu.CompilerParams(
            dimension_semantics=("parallel", "arbitrary"),
            vmem_limit_bytes=vmem_limit),
        cost_estimate=cost,
    )(alphas, x_p, w1_p, w2_p)

    return out[:m, :dim].reshape(orig_shape)


def reference_ffn(x, w1_t, w2_t, alpha1, alpha2):
    """Plain-JAX mirror of the PyTorch forward (QuantReLU forward semantics)."""
    def quant_relu(v, a):
        v = jnp.maximum(v, 0.0)
        vc = jnp.clip(v / a, 0.0, 1.0)
        vq = jnp.round(vc * QLEVELS) / QLEVELS
        return vq * a
    h = quant_relu(x @ w1_t, alpha1)
    return quant_relu(h @ w2_t, alpha2)


if __name__ == "__main__":
    # Small shapes consistent with the module: embed (dim)=32, ffn_hidden=64,
    # batch=2, seq=8.
    batch, seq, dim, hidden = 2, 8, 32, 64

    key = jax.random.PRNGKey(0)
    kx, kw1, kw2 = jax.random.split(key, 3)

    x = jax.random.normal(kx, (batch, seq, dim), dtype=jnp.float32)

    # nn.Linear default init: U(-1/sqrt(fan_in), 1/sqrt(fan_in)); weights stored
    # pre-transposed for the x @ W layout the kernel uses.
    b1 = 1.0 / (dim ** 0.5)
    b2 = 1.0 / (hidden ** 0.5)
    w1_t = jax.random.uniform(kw1, (dim, hidden), jnp.float32, -b1, b1)   # linear1.weight.T
    w2_t = jax.random.uniform(kw2, (hidden, dim), jnp.float32, -b2, b2)   # linear2.weight.T

    # QuantReLU act_alpha parameters (init value 8.0 in the module).
    alpha_init, alpha_spike1 = 8.0, 8.0

    out = ffn_pallas(x, w1_t, w2_t, alpha_init, alpha_spike1)
    out = jax.block_until_ready(out)

    ref = reference_ffn(x, w1_t, w2_t, alpha_init, alpha_spike1)

    assert out.shape == x.shape and out.dtype == x.dtype
    err = jnp.abs(out - ref)
    quant_step = alpha_spike1 / QLEVELS
    # Outputs match to float noise; a rare round-half tie could at most move a
    # single element by one quantization level (see kernel docstring), never more.
    assert float(jnp.max(err)) <= quant_step + 1e-5, float(jnp.max(err))
    assert float(jnp.mean((err <= 1e-5).astype(jnp.float32))) >= 0.99

    print("KERNEL_OK")
</pallas_src>

<mosaic_0001>
module attributes {stable_mosaic.version = 11 : i64} {
  func.func @ffn_kernel(%arg0: i32, %arg1: i32, %arg2: memref<2xf32, #tpu.memory_space<smem>>, %arg3: memref<16x128xf32, #tpu.memory_space<vmem>>, %arg4: memref<128x128xf32, #tpu.memory_space<vmem>>, %arg5: memref<128x128xf32, #tpu.memory_space<vmem>>, %arg6: memref<16x128xf32, #tpu.memory_space<vmem>>, %arg7: memref<16x128xf32, #tpu.memory_space<vmem>>) attributes {dimension_semantics = [#tpu.dimension_semantics<parallel>, #tpu.dimension_semantics<arbitrary>], iteration_bounds = array<i64: 1, 1>, scalar_prefetch = 1 : i64, scratch_operands = 1 : i64, tpu.core_type = #tpu.core_type<tc>, window_params = [{transform_indices = @transform_0, window_bounds = array<i64: 16, 128>}, {transform_indices = @transform_1, window_bounds = array<i64: 128, 128>}, {transform_indices = @transform_2, window_bounds = array<i64: 128, 128>}, {transform_indices = @transform_3, window_bounds = array<i64: 16, 128>}]} {
    %c0_i32 = arith.constant 0 : i32
    %0 = arith.cmpi eq, %arg1, %c0_i32 : i32
    %1 = arith.extui %0 : i1 to i32
    %c0_i32_0 = arith.constant 0 : i32
    %2 = arith.cmpi ne, %1, %c0_i32_0 : i32
    scf.if %2 {
      %cst_18 = arith.constant 0.000000e+00 : f32
      %26 = vector.broadcast %cst_18 : f32 to vector<16x128xf32>
      %c0_19 = arith.constant 0 : index
      %c0_20 = arith.constant 0 : index
      %27 = vector.load %arg7[%c0_19, %c0_20] : memref<16x128xf32, #tpu.memory_space<vmem>>, vector<16x128xf32>
      tpu.vector_store %arg7[%c0_19, %c0_20], %26 {strides = array<i32>} : memref<16x128xf32, #tpu.memory_space<vmem>>, vector<16x128xf32>,
    } else {
    }
    %c0 = arith.constant 0 : index
    %3 = memref.load %arg2[%c0] : memref<2xf32, #tpu.memory_space<smem>>
    %cst = arith.constant 6.300000e+01 : f32
    %4 = arith.divf %cst, %3 : f32
    %cst_1 = arith.constant 0.0158730168 : f32
    %5 = arith.mulf %3, %cst_1 : f32
    %c0_2 = arith.constant 0 : index
    %c0_3 = arith.constant 0 : index
    %6 = vector.load %arg3[%c0_2, %c0_3] : memref<16x128xf32, #tpu.memory_space<vmem>>, vector<16x128xf32>
    %c0_4 = arith.constant 0 : index
    %c0_5 = arith.constant 0 : index
    %7 = vector.load %arg4[%c0_4, %c0_5] : memref<128x128xf32, #tpu.memory_space<vmem>>, vector<128x128xf32>
    %cst_6 = arith.constant dense<0.000000e+00> : vector<16x128xf32>
    %8 = tpu.matmul %6, %7, %cst_6 {dimension_numbers = #tpu.dot_dimension_numbers<[1], [0], [0], [1], [0, 0, 1, 1], [], []>} : vector<16x128xf32>, vector<128x128xf32>, vector<16x128xf32> -> vector<16x128xf32>
    %9 = vector.broadcast %4 : f32 to vector<16x128xf32>
    %10 = arith.mulf %8, %9 : vector<16x128xf32>
    %cst_7 = arith.constant 0.000000e+00 : f32
    %cst_8 = arith.constant 6.300000e+01 : f32
    %11 = vector.broadcast %cst_7 : f32 to vector<16x128xf32>
    %12 = arith.maximumf %11, %10 : vector<16x128xf32>
    %13 = vector.broadcast %cst_8 : f32 to vector<16x128xf32>
    %14 = arith.minimumf %13, %12 : vector<16x128xf32>
    %15 = math.roundeven %14 : vector<16x128xf32>
    %16 = vector.broadcast %5 : f32 to vector<16x128xf32>
    %17 = arith.mulf %15, %16 : vector<16x128xf32>
    %c0_9 = arith.constant 0 : index
    %c0_10 = arith.constant 0 : index
    %18 = vector.load %arg7[%c0_9, %c0_10] : memref<16x128xf32, #tpu.memory_space<vmem>>, vector<16x128xf32>
    %c0_11 = arith.constant 0 : index
    %c0_12 = arith.constant 0 : index
    %19 = vector.load %arg5[%c0_11, %c0_12] : memref<128x128xf32, #tpu.memory_space<vmem>>, vector<128x128xf32>
    %cst_13 = arith.constant dense<0.000000e+00> : vector<16x128xf32>
    %20 = tpu.matmul %17, %19, %cst_13 {dimension_numbers = #tpu.dot_dimension_numbers<[1], [0], [0], [1], [0, 0, 1, 1], [], []>} : vector<16x128xf32>, vector<128x128xf32>, vector<16x128xf32> -> vector<16x128xf32>
    %21 = arith.addf %18, %20 : vector<16x128xf32>
    %c0_14 = arith.constant 0 : index
    %c0_15 = arith.constant 0 : index
    %22 = vector.load %arg7[%c0_14, %c0_15] : memref<16x128xf32, #tpu.memory_space<vmem>>, vector<16x128xf32>
    tpu.vector_store %arg7[%c0_14, %c0_15], %21 {strides = array<i32>} : memref<16x128xf32, #tpu.memory_space<vmem>>, vector<16x128xf32>,
    %c0_i32_16 = arith.constant 0 : i32
    %23 = arith.cmpi eq, %arg1, %c0_i32_16 : i32
    %24 = arith.extui %23 : i1 to i32
    %c0_i32_17 = arith.constant 0 : i32
    %25 = arith.cmpi ne, %24, %c0_i32_17 : i32
    scf.if %25 {
      %c1 = arith.constant 1 : index
      %26 = memref.load %arg2[%c1] : memref<2xf32, #tpu.memory_space<smem>>
      %cst_18 = arith.constant 6.300000e+01 : f32
      %27 = arith.divf %cst_18, %26 : f32
      %cst_19 = arith.constant 0.0158730168 : f32
      %28 = arith.mulf %26, %cst_19 : f32
      %c0_20 = arith.constant 0 : index
      %c0_21 = arith.constant 0 : index
      %29 = vector.load %arg7[%c0_20, %c0_21] : memref<16x128xf32, #tpu.memory_space<vmem>>, vector<16x128xf32>
      %30 = vector.broadcast %27 : f32 to vector<16x128xf32>
      %31 = arith.mulf %29, %30 : vector<16x128xf32>
      %cst_22 = arith.constant 0.000000e+00 : f32
      %cst_23 = arith.constant 6.300000e+01 : f32
      %32 = vector.broadcast %cst_22 : f32 to vector<16x128xf32>
      %33 = arith.maximumf %32, %31 : vector<16x128xf32>
      %34 = vector.broadcast %cst_23 : f32 to vector<16x128xf32>
      %35 = arith.minimumf %34, %33 : vector<16x128xf32>
      %36 = math.roundeven %35 : vector<16x128xf32>
      %37 = vector.broadcast %28 : f32 to vector<16x128xf32>
      %38 = arith.mulf %36, %37 : vector<16x128xf32>
      %c0_24 = arith.constant 0 : index
      %c0_25 = arith.constant 0 : index
      %39 = vector.load %arg6[%c0_24, %c0_25] : memref<16x128xf32, #tpu.memory_space<vmem>>, vector<16x128xf32>
      tpu.vector_store %arg6[%c0_24, %c0_25], %38 {strides = array<i32>} : memref<16x128xf32, #tpu.memory_space<vmem>>, vector<16x128xf32>,
    } else {
    }
    return
  }
  func.func @transform_0(%arg0: i32, %arg1: i32, %arg2: memref<2xf32, #tpu.memory_space<smem>>) -> (i32, i32) {
    %c0_i32 = arith.constant 0 : i32
    %c0_i32_0 = arith.constant 0 : i32
    return %arg0, %c0_i32 : i32, i32
  }
  func.func @transform_1(%arg0: i32, %arg1: i32, %arg2: memref<2xf32, #tpu.memory_space<smem>>) -> (i32, i32) {
    %c0_i32 = arith.constant 0 : i32
    %c0_i32_0 = arith.constant 0 : i32
    return %c0_i32, %arg1 : i32, i32
  }
  func.func @transform_2(%arg0: i32, %arg1: i32, %arg2: memref<2xf32, #tpu.memory_space<smem>>) -> (i32, i32) {
    %c0_i32 = arith.constant 0 : i32
    %c0_i32_0 = arith.constant 0 : i32
    return %arg1, %c0_i32 : i32, i32
  }
  func.func @transform_3(%arg0: i32, %arg1: i32, %arg2: memref<2xf32, #tpu.memory_space<smem>>) -> (i32, i32) {
    %c0_i32 = arith.constant 0 : i32
    %c0_i32_0 = arith.constant 0 : i32
    return %arg0, %c0_i32 : i32, i32
  }
}

</mosaic_0001>

<llo_original>
// kernel: tpu_custom_call.1
$region0: #{tpu_custom_call.1}
  #allocation0 [shape = 'u32[]', space=smem, size = 0x4, offset = 0x4, fixed_abs, tag = 'smem constant byte address 0x4 - core index']
  #allocation1 [shape = 'u32[144,128]{1,0:T(1,128)}', space=vmem, size = 0x12000, scoped, tag = 'internal scratch']
  #allocation2 [shape = 'f32[16,128]{1,0:T(8,128)}', space=vmem, size = 0x2000, scoped, tag = 'scratch operand']
  #allocation3 [shape = 's32[1]{0}', space=sflag, size = 0x4, scoped, tag = 'scoped memory for tpu_custom_call.1']
  #allocation4 [shape = 'u8[512]{0}', space=smem, size = 0x200, scoped, tag = 'prefetched SMEM operand 0']
  %s0 = inlined_call_operand.hbm [shape: f32[2], index: 0, kind: input, shape index: {}]
  %s1 = inlined_call_operand.hbm [shape: f32[16,128], index: 1, kind: input, shape index: {}]
  %s2 = inlined_call_operand.hbm [shape: f32[128,128], index: 2, kind: input, shape index: {}]
  %s3 = inlined_call_operand.hbm [shape: f32[128,128], index: 3, kind: input, shape index: {}]
  %s4 = inlined_call_operand.hbm [shape: f32[16,128], index: 4, kind: output, shape index: {}]
  %s5 = sld [smem:[#allocation0]]
  $region42: #{tpu_custom_call.1} parent=0
    _
  %s7 = ssub.s32 1, %s5
  %s8 = scalar_select 0, %s7, %s5
  %10 = dma.hbm_to_smem %s0, 16, [#allocation4], [#allocation3]
  %11 = dma.done [#allocation3], 16
  %12 = sfence
  $region1: #{tpu_custom_call.1} parent=0
    #allocation5 [shape = 'u8[8192]{0}', space=vmem, size = 0x2000, scoped, tag = 'input window, operand 1, single buffered']
    #allocation6 [shape = 's32[1]{0}', space=sflag, size = 0x4, scoped, tag = 'scoped memory for tpu_custom_call.1']
    #allocation7 [shape = 's32[1]{0}', space=sflag, size = 0x4, scoped, tag = 'scoped memory for tpu_custom_call.1']
    #allocation8 [shape = 'u8[65536]{0}', space=vmem, size = 0x10000, scoped, tag = 'input window, operand 2, single buffered']
    #allocation9 [shape = 's32[1]{0}', space=sflag, size = 0x4, scoped, tag = 'scoped memory for tpu_custom_call.1']
    #allocation10 [shape = 'u8[65536]{0}', space=vmem, size = 0x10000, scoped, tag = 'input window, operand 3, single buffered']
    #allocation11 [shape = 'u8[8192]{0}', space=vmem, size = 0x2000, scoped, tag = 'output window, operand 0, single buffered']
    %13 = vsyncpa [#allocation6], 0
    %14 = vsyncpa [#allocation9], 0
    %15 = vsyncpa [#allocation7], 0
    // Predicated region
    $region2: #{tpu_custom_call.1} parent=1 // pred_check
      _
    $region3: #{tpu_custom_call.1} parent=1 // pred_check_branch
      %17 = sbr.rel (0) target = $region5
    $region4: #{tpu_custom_call.1} parent=1 // pred_region
      %s19 = ssub.s32 256, 256
      %20 = vsyncadd [#allocation6], %s19
      %s21 = sshll.u32 [#allocation5], 4
      %s22 = int_to_ptr.vmem [resolvable:$true] %s21
      %27 = dma.hbm_to_vmem [thread:$0]  %s1, 256, %s22, [#allocation6], 128, 128, 8
    $region5: #{tpu_custom_call.1} parent=1 // pred_fallthru
      _
    // Predicated region
    $region6: #{tpu_custom_call.1} parent=1 // pred_check
      _
    $region7: #{tpu_custom_call.1} parent=1 // pred_check_branch
      %29 = sbr.rel (0) target = $region9
    $region8: #{tpu_custom_call.1} parent=1 // pred_region
      %s31 = ssub.s32 2048, 2048
      %32 = vsyncadd [#allocation9], %s31
      %s33 = sshll.u32 [#allocation8], 4
      %s34 = int_to_ptr.vmem [resolvable:$true] %s33
      %39 = dma.hbm_to_vmem [thread:$0]  %s2, 2048, %s34, [#allocation9], 128, 128, 8
    $region9: #{tpu_custom_call.1} parent=1 // pred_fallthru
      _
    // Predicated region
    $region10: #{tpu_custom_call.1} parent=1 // pred_check
      _
    $region11: #{tpu_custom_call.1} parent=1 // pred_check_branch
      %41 = sbr.rel (0) target = $region13
    $region12: #{tpu_custom_call.1} parent=1 // pred_region
      %s43 = ssub.s32 2048, 2048
      %44 = vsyncadd [#allocation9], %s43
      %s45 = sshll.u32 [#allocation10], 4
      %s46 = int_to_ptr.vmem [resolvable:$true] %s45
      %51 = dma.hbm_to_vmem [thread:$0]  %s3, 2048, %s46, [#allocation9], 128, 128, 8
    $region13: #{tpu_custom_call.1} parent=1 // pred_fallthru
      _
    // Predicated region
    $region14: #{tpu_custom_call.1} parent=1 // pred_check
      _
    $region15: #{tpu_custom_call.1} parent=1 // pred_check_branch
      %53 = sbr.rel (0) target = $region17
    $region16: #{tpu_custom_call.1} parent=1 // pred_region
      %54 = dma.done [#allocation6], 256
    $region17: #{tpu_custom_call.1} parent=1 // pred_fallthru
      _
    // Predicated region
    $region18: #{tpu_custom_call.1} parent=1 // pred_check
      _
    $region19: #{tpu_custom_call.1} parent=1 // pred_check_branch
      %56 = sbr.rel (0) target = $region21
    $region20: #{tpu_custom_call.1} parent=1 // pred_region
      %57 = dma.done [#allocation9], 2048
    $region21: #{tpu_custom_call.1} parent=1 // pred_fallthru
      _
    // Predicated region
    $region22: #{tpu_custom_call.1} parent=1 // pred_check
      _
    $region23: #{tpu_custom_call.1} parent=1 // pred_check_branch
      %59 = sbr.rel (0) target = $region25
    $region24: #{tpu_custom_call.1} parent=1 // pred_region
      %60 = dma.done [#allocation9], 2048
    $region25: #{tpu_custom_call.1} parent=1 // pred_fallthru
      _
    %p61 = scmp.eq.s32.totalorder 0, 0
    // Predicated region
    $region26: #{tpu_custom_call.1} parent=1 // pred_check
      %p62 = pneg %p61
    $region27: #{tpu_custom_call.1} parent=1 // pred_check_branch
      %64 = sbr.rel (%p62) target = $region29
    $region28: #{tpu_custom_call.1} parent=1 // pred_region
      %65 = vst [vmem:[#allocation2] sm:$0xff] 0.0
      %66 = vst [vmem:[#allocation2 + $0x8] sm:$0xff] 0.0
    $region29: #{tpu_custom_call.1} parent=1 // pred_fallthru
      _
    %s67 = sld [smem:[#allocation4]]
    %v68 = vstv %s67
    %v69 = vrcp.pop %v68
    %s70 = vtos %v69
    %s71 = smul.f32 63.0, %s70
    %s72 = smul.f32 %s67, 0.015873017
    %v73 = vld [vmem:[#allocation5] sm:$0xff]
    %v74 = vld [vmem:[#allocation5 + $0x8] sm:$0xff]
    %v75 = vld [vmem:[#allocation8] sm:$0xff]
    %v76 = vld [vmem:[#allocation8 + $0x8] sm:$0xff]
    %v77 = vld [vmem:[#allocation8 + $0x10] sm:$0xff]
    %v78 = vld [vmem:[#allocation8 + $0x18] sm:$0xff]
    %v79 = vld [vmem:[#allocation8 + $0x20] sm:$0xff]
    %v80 = vld [vmem:[#allocation8 + $0x28] sm:$0xff]
    %v81 = vld [vmem:[#allocation8 + $0x30] sm:$0xff]
    %v82 = vld [vmem:[#allocation8 + $0x38] sm:$0xff]
    %v83 = vld [vmem:[#allocation8 + $0x40] sm:$0xff]
    %v84 = vld [vmem:[#allocation8 + $0x48] sm:$0xff]
    %v85 = vld [vmem:[#allocation8 + $0x50] sm:$0xff]
    %v86 = vld [vmem:[#allocation8 + $0x58] sm:$0xff]
    %v87 = vld [vmem:[#allocation8 + $0x60] sm:$0xff]
    %v88 = vld [vmem:[#allocation8 + $0x68] sm:$0xff]
    %v89 = vld [vmem:[#allocation8 + $0x70] sm:$0xff]
    %v90 = vld [vmem:[#allocation8 + $0x78] sm:$0xff]
    %91 = vmatprep.subr.mxu0 0.0
    %92 = vmatpush1.msra.mxu0 %v90
    %93 = vmatprep.subr.mxu0 0.0
    %94 = vmatpush1.msra.mxu0 %v89
    %95 = vmatprep.subr.mxu0 0.0
    %96 = vmatpush1.msra.mxu0 %v88
    %97 = vmatprep.subr.mxu0 0.0
    %98 = vmatpush1.msra.mxu0 %v87
    %99 = vmatprep.subr.mxu0 0.0
    %100 = vmatpush1.msra.mxu0 %v86
    %101 = vmatprep.subr.mxu0 0.0
    %102 = vmatpush1.msra.mxu0 %v85
    %103 = vmatprep.subr.mxu0 0.0
    %104 = vmatpush1.msra.mxu0 %v84
    %105 = vmatprep.subr.mxu0 0.0
    %106 = vmatpush1.msra.mxu0 %v83
    %107 = vmatprep.subr.mxu0 0.0
    %108 = vmatpush1.msra.mxu0 %v82
    %109 = vmatprep.subr.mxu0 0.0
    %110 = vmatpush1.msra.mxu0 %v81
    %111 = vmatprep.subr.mxu0 0.0
    %112 = vmatpush1.msra.mxu0 %v80
    %113 = vmatprep.subr.mxu0 0.0
    %114 = vmatpush1.msra.mxu0 %v79
    %115 = vmatprep.subr.mxu0 0.0
    %116 = vmatpush1.msra.mxu0 %v78
    %117 = vmatprep.subr.mxu0 0.0
    %118 = vmatpush1.msra.mxu0 %v77
    %119 = vmatprep.subr.mxu0 0.0
    %120 = vmatpush1.msra.mxu0 %v76
    %121 = vmatprep.subr.mxu0 0.0
    %122 = vmatpush1.msra.mxu0 %v75
    %123 = vmatprep.subr.mxu0 0.0
    %124 = vmatpush2.msra.mxu0 0.0
    %125 = vmatprep.subr.mxu0 0.0
    %126 = vmatpush2.msra.mxu0 0.0
    %127 = vmatprep.subr.mxu0 0.0
    %128 = vmatpush2.msra.mxu0 0.0
    %129 = vmatprep.subr.mxu0 0.0
    %130 = vmatpush2.msra.mxu0 0.0
    %131 = vmatprep.subr.mxu0 0.0
    %132 = vmatpush2.msra.mxu0 0.0
    %133 = vmatprep.subr.mxu0 0.0
    %134 = vmatpush2.msra.mxu0 0.0
    %135 = vmatprep.subr.mxu0 0.0
    %136 = vmatpush2.msra.mxu0 0.0
    %137 = vmatprep.subr.mxu0 0.0
    %138 = vmatpush2.msra.mxu0 0.0
    %139 = vmatprep.subr.mxu0 0.0
    %140 = vmatpush2.msra.mxu0 0.0
    %141 = vmatprep.subr.mxu0 0.0
    %142 = vmatpush2.msra.mxu0 0.0
    %143 = vmatprep.subr.mxu0 0.0
    %144 = vmatpush2.msra.mxu0 0.0
    %145 = vmatprep.subr.mxu0 0.0
    %146 = vmatpush2.msra.mxu0 0.0
    %147 = vmatprep.subr.mxu0 0.0
    %148 = vmatpush2.msra.mxu0 0.0
    %149 = vmatprep.subr.mxu0 0.0
    %150 = vmatpush2.msra.mxu0 0.0
    %151 = vmatprep.subr.mxu0 0.0
    %152 = vmatpush2.msra.mxu0 0.0
    %153 = vmatprep.subr.mxu0 0.0
    %154 = vmatpush2.msra.mxu0 0.0
    %155 = vmatprep.mubr.f32.mxu0 0.0
    %156 = vmatmul.mubr.f32.gmra.mxu0 %v73
    %v157 = vpop.f32.mrf.mxu0
    %v158 = vadd.f32 0.0, %v157
    %v159 = vpop.f32.mrf.mxu0
    %160 = vmatprep.mubr.f32.mxu0 0.0
    %161 = vmatmul.mubr.f32.gmra.mxu0 %v74
    %v162 = vpop.f32.mrf.mxu0
    %v163 = vadd.f32 0.0, %v162
    %v164 = vpop.f32.mrf.mxu0
    %165 = vdwg.mxu0
    %v166 = vstv %s71
    %v167 = vmul.f32 %v158, %v166
    %v168 = vmul.f32 %v163, %v166
    %v169 = vmax.f32 %v167, 0.0
    %v170 = vmax.f32 %v168, 0.0
    %v171 = vmin.f32 %v169, 63.0
    %v172 = vmin.f32 %v170, 63.0
    %v173 = vround.ne.pseudo %v171
    %v174 = vround.ne.pseudo %v172
    %v175 = vstv %s72
    %v176 = vmul.f32 %v173, %v175
    %v177 = vmul.f32 %v174, %v175
    %v178 = vld [vmem:[#allocation2] sm:$0xff]
    %v179 = vld [vmem:[#allocation2 + $0x8] sm:$0xff]
    %v180 = vld [vmem:[#allocation10] sm:$0xff]
    %v181 = vld [vmem:[#allocation10 + $0x8] sm:$0xff]
    %v182 = vld [vmem:[#allocation10 + $0x10] sm:$0xff]
    %v183 = vld [vmem:[#allocation10 + $0x18] sm:$0xff]
    %v184 = vld [vmem:[#allocation10 + $0x20] sm:$0xff]
    %v185 = vld [vmem:[#allocation10 + $0x28] sm:$0xff]
    %v186 = vld [vmem:[#allocation10 + $0x30] sm:$0xff]
    %v187 = vld [vmem:[#allocation10 + $0x38] sm:$0xff]
    %v188 = vld [vmem:[#allocation10 + $0x40] sm:$0xff]
    %v189 = vld [vmem:[#allocation10 + $0x48] sm:$0xff]
    %v190 = vld [vmem:[#allocation10 + $0x50] sm:$0xff]
    %v191 = vld [vmem:[#allocation10 + $0x58] sm:$0xff]
    %v192 = vld [vmem:[#allocation10 + $0x60] sm:$0xff]
    %v193 = vld [vmem:[#allocation10 + $0x68] sm:$0xff]
    %v194 = vld [vmem:[#allocation10 + $0x70] sm:$0xff]
    %v195 = vld [vmem:[#allocation10 + $0x78] sm:$0xff]
    %196 = vmatprep.subr.mxu0 0.0
    %197 = vmatpush1.msra.mxu0 %v195
    %198 = vmatprep.subr.mxu0 0.0
    %199 = vmatpush1.msra.mxu0 %v194
    %200 = vmatprep.subr.mxu0 0.0
    %201 = vmatpush1.msra.mxu0 %v193
    %202 = vmatprep.subr.mxu0 0.0
    %203 = vmatpush1.msra.mxu0 %v192
    %204 = vmatprep.subr.mxu0 0.0
    %205 = vmatpush1.msra.mxu0 %v191
    %206 = vmatprep.subr.mxu0 0.0
    %207 = vmatpush1.msra.mxu0 %v190
    %208 = vmatprep.subr.mxu0 0.0
    %209 = vmatpush1.msra.mxu0 %v189
    %210 = vmatprep.subr.mxu0 0.0
    %211 = vmatpush1.msra.mxu0 %v188
    %212 = vmatprep.subr.mxu0 0.0
    %213 = vmatpush1.msra.mxu0 %v187
    %214 = vmatprep.subr.mxu0 0.0
    %215 = vmatpush1.msra.mxu0 %v186
    %216 = vmatprep.subr.mxu0 0.0
    %217 = vmatpush1.msra.mxu0 %v185
    %218 = vmatprep.subr.mxu0 0.0
    %219 = vmatpush1.msra.mxu0 %v184
    %220 = vmatprep.subr.mxu0 0.0
    %221 = vmatpush1.msra.mxu0 %v183
    %222 = vmatprep.subr.mxu0 0.0
    %223 = vmatpush1.msra.mxu0 %v182
    %224 = vmatprep.subr.mxu0 0.0
    %225 = vmatpush1.msra.mxu0 %v181
    %226 = vmatprep.subr.mxu0 0.0
    %227 = vmatpush1.msra.mxu0 %v180
    %228 = vmatprep.subr.mxu0 0.0
    %229 = vmatpush2.msra.mxu0 0.0
    %230 = vmatprep.subr.mxu0 0.0
    %231 = vmatpush2.msra.mxu0 0.0
    %232 = vmatprep.subr.mxu0 0.0
    %233 = vmatpush2.msra.mxu0 0.0
    %234 = vmatprep.subr.mxu0 0.0
    %235 = vmatpush2.msra.mxu0 0.0
    %236 = vmatprep.subr.mxu0 0.0
    %237 = vmatpush2.msra.mxu0 0.0
    %238 = vmatprep.subr.mxu0 0.0
    %239 = vmatpush2.msra.mxu0 0.0
    %240 = vmatprep.subr.mxu0 0.0
    %241 = vmatpush2.msra.mxu0 0.0
    %242 = vmatprep.subr.mxu0 0.0
    %243 = vmatpush2.msra.mxu0 0.0
    %244 = vmatprep.subr.mxu0 0.0
    %245 = vmatpush2.msra.mxu0 0.0
    %246 = vmatprep.subr.mxu0 0.0
    %247 = vmatpush2.msra.mxu0 0.0
    %248 = vmatprep.subr.mxu0 0.0
    %249 = vmatpush2.msra.mxu0 0.0
    %250 = vmatprep.subr.mxu0 0.0
    %251 = vmatpush2.msra.mxu0 0.0
    %252 = vmatprep.subr.mxu0 0.0
    %253 = vmatpush2.msra.mxu0 0.0
    %254 = vmatprep.subr.mxu0 0.0
    %255 = vmatpush2.msra.mxu0 0.0
    %256 = vmatprep.subr.mxu0 0.0
    %257 = vmatpush2.msra.mxu0 0.0
    %258 = vmatprep.subr.mxu0 0.0
    %259 = vmatpush2.msra.mxu0 0.0
    %260 = vmatprep.mubr.f32.mxu0 0.0
    %261 = vmatmul.mubr.f32.gmra.mxu0 %v176
    %v262 = vpop.f32.mrf.mxu0
    %v263 = vadd.f32 0.0, %v262
    %v264 = vpop.f32.mrf.mxu0
    %265 = vmatprep.mubr.f32.mxu0 0.0
    %266 = vmatmul.mubr.f32.gmra.mxu0 %v177
    %v267 = vpop.f32.mrf.mxu0
    %v268 = vadd.f32 0.0, %v267
    %v269 = vpop.f32.mrf.mxu0
    %270 = vdwg.mxu0
    %v271 = vadd.f32 %v178, %v263
    %v272 = vadd.f32 %v179, %v268
    %273 = vst [vmem:[#allocation2] sm:$0xff] %v271
    %274 = vst [vmem:[#allocation2 + $0x8] sm:$0xff] %v272
    // Predicated region
    $region30: #{tpu_custom_call.1} parent=1 // pred_check
      %p275 = pneg %p61
    $region31: #{tpu_custom_call.1} parent=1 // pred_check_branch
      %277 = sbr.rel (%p275) target = $region33
    $region32: #{tpu_custom_call.1} parent=1 // pred_region
      %s278 = sld [smem:[#allocation4 + $0x1]]
      %v279 = vstv %s278
      %v280 = vrcp.pop %v279
      %s281 = vtos %v280
      %s282 = smul.f32 63.0, %s281
      %s283 = smul.f32 %s278, 0.015873017
      %v284 = vld [vmem:[#allocation2] sm:$0xff]
      %v285 = vld [vmem:[#allocation2 + $0x8] sm:$0xff]
      %v286 = vstv %s282
      %v287 = vmul.f32 %v284, %v286
      %v288 = vmul.f32 %v285, %v286
      %v289 = vmax.f32 %v287, 0.0
      %v290 = vmax.f32 %v288, 0.0
      %v291 = vmin.f32 %v289, 63.0
      %v292 = vmin.f32 %v290, 63.0
      %v293 = vround.ne.pseudo %v291
      %v294 = vround.ne.pseudo %v292
      %v295 = vstv %s283
      %v296 = vmul.f32 %v293, %v295
      %v297 = vmul.f32 %v294, %v295
      %298 = vst [vmem:[#allocation11] sm:$0xff] %v296
      %299 = vst [vmem:[#allocation11 + $0x8] sm:$0xff] %v297
    $region33: #{tpu_custom_call.1} parent=1 // pred_fallthru
      _
    // Predicated region
    $region34: #{tpu_custom_call.1} parent=1 // pred_check
      _
    $region35: #{tpu_custom_call.1} parent=1 // pred_check_branch
      %301 = sbr.rel (0) target = $region37
    $region36: #{tpu_custom_call.1} parent=1 // pred_region
      %s303 = ssub.s32 256, 256
      %304 = vsyncadd [#allocation7], %s303
      %s305 = sshll.u32 [#allocation11], 4
      %s306 = int_to_ptr.vmem [resolvable:$true] %s305
      %311 = dma.vmem_to_hbm [thread:$0]  %s306, 256, %s4, [#allocation7], 128, 128, 8
    $region37: #{tpu_custom_call.1} parent=1 // pred_fallthru
      _
    // Predicated region
    $region38: #{tpu_custom_call.1} parent=1 // pred_check
      _
    $region39: #{tpu_custom_call.1} parent=1 // pred_check_branch
      %313 = sbr.rel (0) target = $region41
    $region40: #{tpu_custom_call.1} parent=1 // pred_region
      %314 = dma.done [#allocation7], 256
    $region41: #{tpu_custom_call.1} parent=1 // pred_fallthru
      _
    %315 = vsyncpa [#allocation6], 1
    %316 = vsyncpa [#allocation9], 1
    %317 = vsyncpa [#allocation7], 1

</llo_original>
